<compile_context>
chip_gen: v5e
topology: v5e:2x2
jax: 0.10.0
libtpu: 0.0.40
codegen_flags: <defaults>
</compile_context>

<pallas_src>
import functools

import jax
import jax.numpy as jnp
import numpy as np
from jax.experimental import pallas as pl
from jax.experimental.pallas import tpu as pltpu


def nafblock_kernel(x_ref, edge_ref, w1_ref, wsca_ref, w3_ref, w4_ref, w5_ref,
                    pc_ref, p2c_ref, o_ref, *, eps, W, C):
    # x_ref / o_ref: (C, H*W) f32 — channels on sublanes, flat spatial on lanes.
    x = x_ref[...]
    HW = x.shape[-1]

    # --- load the small packed parameter blocks ONCE, slice in registers -----
    pc = pc_ref[...]       # (C, 3):  bsca | b3f | b5f
    p2c = p2c_ref[...]     # (2C,12): 9 dw taps | b1f | b2 | b4f
    edge = edge_ref[...]   # (4, HW): {0,1} boundary masks

    bsca, b3f, b5f = pc[:, 0:1], pc[:, 1:2], pc[:, 2:3]
    b1f, b2, b4f = p2c[:, 9:10], p2c[:, 10:11], p2c[:, 11:12]

    not_top = edge[0:1, :]   # 0 where h == 0
    not_bot = edge[1:2, :]   # 0 where h == H-1
    not_lft = edge[2:3, :]   # 0 where w == 0
    not_rgt = edge[3:4, :]   # 0 where w == W-1

    def norm(t):
        # channels_first LayerNorm, affine already folded into the next conv.
        u = jnp.mean(t, axis=0, keepdims=True)
        s = jnp.mean((t - u) ** 2, axis=0, keepdims=True)
        return (t - u) * jax.lax.rsqrt(s + eps)

    def dwconv3x3(t):
        # 3x3 depthwise conv, padding=1, on (2C, HW): masked lane-rolls (XLU).
        # Row mask applied once per row-rolled tensor and reused by its 3 taps.
        acc = None
        for r, dy in enumerate((-1, 0, 1)):
            shift_r = (-(dy * W)) % HW
            row = pltpu.roll(t, shift=shift_r, axis=1) if shift_r else t
            if dy == -1:
                row = row * not_top
            elif dy == 1:
                row = row * not_bot
            for cix, dx in enumerate((-1, 0, 1)):
                k = r * 3 + cix                       # tap index (dy+1)*3+(dx+1)
                shift_c = (-dx) % HW
                tap = pltpu.roll(row, shift=shift_c, axis=1) if shift_c else row
                if dx == -1:
                    tap = tap * not_lft
                elif dx == 1:
                    tap = tap * not_rgt
                contrib = tap * p2c[:, k:k + 1]       # per-channel tap weight
                acc = contrib if acc is None else acc + contrib
        return acc + b2

    # ----- attention branch ---------------------------------------------------
    xn = norm(x)
    # conv1 (1x1, C -> 2C) with LN1 affine folded: one MXU matmul (2C,C)@(C,HW)
    x1 = jnp.dot(w1_ref[...], xn, preferred_element_type=jnp.float32) + b1f
    z = dwconv3x3(x1)                                  # (2C, HW)
    g = z[:C, :] * z[C:, :]                            # SimpleGate
    pooled = jnp.mean(g, axis=1, keepdims=True)        # AdaptiveAvgPool2d(1) -> (C,1)
    sca = jnp.dot(wsca_ref[...], pooled,
                  preferred_element_type=jnp.float32) + bsca
    g = g * sca                                        # channel attention
    # conv3 with beta folded in; dropout1 is Identity (drop_out_rate == 0)
    y = x + jnp.dot(w3_ref[...], g, preferred_element_type=jnp.float32) + b3f

    # ----- FFN branch -----------------------------------------------------------
    yn = norm(y)
    # conv4 (1x1, C -> 2C) with LN2 affine folded: one MXU matmul
    f = jnp.dot(w4_ref[...], yn, preferred_element_type=jnp.float32) + b4f
    fg = f[:C, :] * f[C:, :]                           # SimpleGate
    # conv5 with gamma folded in; dropout2 is Identity
    o_ref[...] = y + jnp.dot(w5_ref[...], fg,
                             preferred_element_type=jnp.float32) + b5f


@functools.partial(jax.jit, static_argnames=("eps",))
def nafblock_pallas(x_nchw, params, eps=1e-6):
    N, C, H, W = x_nchw.shape
    HW = H * W
    c2 = 2 * C
    x = x_nchw.reshape(N, C, HW).astype(jnp.float32)   # NCHW -> (N, C, H*W)

    P = {k: v.astype(jnp.float32) for k, v in params.items()}

    # --- constant-fold per-channel affines into the 1x1 conv weights ---------
    w1f = P["w1"] * P["ln1w"][None, :]                 # LN1 weight -> conv1 cols
    b1f = P["w1"] @ P["ln1b"] + P["b1"]                # LN1 bias   -> conv1 bias
    w3f = P["beta"][:, None] * P["w3"]                 # beta       -> conv3 rows
    b3f = P["beta"] * P["b3"]
    w4f = P["w4"] * P["ln2w"][None, :]                 # LN2 weight -> conv4 cols
    b4f = P["w4"] @ P["ln2b"] + P["b4"]                # LN2 bias   -> conv4 bias
    w5f = P["gamma"][:, None] * P["w5"]                # gamma      -> conv5 rows
    b5f = P["gamma"] * P["b5"]

    # Pack the remaining tiny per-channel vectors into two matrices (2 DMAs).
    pc = jnp.stack([P["bsca"], b3f, b5f], axis=1)                      # (C, 3)
    p2c = jnp.concatenate(
        [P["w2"].reshape(c2, 9),                                       # dw taps
         b1f[:, None], P["b2"][:, None], b4f[:, None]], axis=1)        # (2C, 12)

    # Static boundary masks for the flattened-HW depthwise conv.
    pos = jnp.arange(HW)
    h_idx, w_idx = pos // W, pos % W
    edge = jnp.stack([h_idx != 0, h_idx != H - 1,
                      w_idx != 0, w_idx != W - 1]).astype(jnp.float32)  # (4, HW)

    statics = [edge, w1f, P["wsca"], w3f, w4f, w5f, pc, p2c]

    def full_spec(a):
        return pl.BlockSpec(a.shape, lambda i: (0, 0))

    out = pl.pallas_call(
        functools.partial(nafblock_kernel, eps=eps, W=W, C=C),
        out_shape=jax.ShapeDtypeStruct((N, C, HW), jnp.float32),
        grid_spec=pltpu.PrefetchScalarGridSpec(
            num_scalar_prefetch=0,
            grid=(N,),
            in_specs=[pl.BlockSpec((None, C, HW), lambda i: (i, 0, 0))]
                     + [full_spec(a) for a in statics],
            out_specs=pl.BlockSpec((None, C, HW), lambda i: (i, 0, 0)),
        ),
        compiler_params=pltpu.CompilerParams(
            dimension_semantics=("parallel",)),   # independent images -> 2 TCs on v7x
    )(x, *statics)
    return out.reshape(N, C, H, W)


def init_params(key, c):
    ks = iter(jax.random.split(key, 24))

    def rnd(shape, scale=0.2):
        return scale * jax.random.normal(next(ks), shape, dtype=jnp.float32)

    c2 = 2 * c
    return dict(
        ln1w=rnd((c,)) + 1.0, ln1b=rnd((c,)),
        w1=rnd((c2, c)), b1=rnd((c2,)),        # conv1 1x1, c -> 2c (out, in)
        w2=rnd((c2, 3, 3)), b2=rnd((c2,)),     # conv2 3x3 depthwise on 2c
        wsca=rnd((c, c)), bsca=rnd((c,)),      # SCA 1x1, c -> c
        w3=rnd((c, c)), b3=rnd((c,)),          # conv3 1x1, c -> c
        beta=rnd((c,)),
        ln2w=rnd((c,)) + 1.0, ln2b=rnd((c,)),
        w4=rnd((c2, c)), b4=rnd((c2,)),        # conv4 1x1, c -> 2c
        w5=rnd((c, c)), b5=rnd((c,)),          # conv5 1x1, c -> c
        gamma=rnd((c,)),
    )


def nafblock_reference(x, P, eps=1e-6):
    # Pure-JAX reference mirroring the PyTorch NCHW forward exactly (unfolded).
    def ln(t, w, b):
        u = t.mean(1, keepdims=True)
        s = ((t - u) ** 2).mean(1, keepdims=True)
        tn = (t - u) / jnp.sqrt(s + eps)
        return w[None, :, None, None] * tn + b[None, :, None, None]

    def c1x1(t, w, b):
        return jnp.einsum("nchw,oc->nohw", t, w) + b[None, :, None, None]

    def dw3x3(t, w, b):
        _, _, H, Wd = t.shape
        tp = jnp.pad(t, ((0, 0), (0, 0), (1, 1), (1, 1)))
        acc = jnp.zeros_like(t)
        for i in range(3):
            for j in range(3):
                acc = acc + tp[:, :, i:i + H, j:j + Wd] * w[:, i, j][None, :, None, None]
        return acc + b[None, :, None, None]

    c = x.shape[1]
    inp = x
    t = ln(x, P["ln1w"], P["ln1b"])
    t = c1x1(t, P["w1"], P["b1"])
    t = dw3x3(t, P["w2"], P["b2"])
    t = t[:, :c] * t[:, c:]                                   # SimpleGate
    pooled = t.mean(axis=(2, 3), keepdims=True)
    sca = jnp.einsum("ncij,oc->noij", pooled, P["wsca"]) + P["bsca"][None, :, None, None]
    t = t * sca
    t = c1x1(t, P["w3"], P["b3"])
    y = inp + t * P["beta"][None, :, None, None]
    t = ln(y, P["ln2w"], P["ln2b"])
    t = c1x1(t, P["w4"], P["b4"])
    t = t[:, :c] * t[:, c:]                                   # SimpleGate
    t = c1x1(t, P["w5"], P["b5"])
    return y + t * P["gamma"][None, :, None, None]


if __name__ == "__main__":
    key = jax.random.PRNGKey(0)
    kx, kp = jax.random.split(key)
    N, C, H, W = 2, 4, 16, 16
    x = jax.random.normal(kx, (N, C, H, W), dtype=jnp.float32)
    params = init_params(kp, C)

    out = nafblock_pallas(x, params)
    out = jax.block_until_ready(out)

    ref = nafblock_reference(x, params)
    np.testing.assert_allclose(np.asarray(out), np.asarray(ref),
                               atol=1e-4, rtol=1e-4)
    print("KERNEL_OK")
</pallas_src>

<mosaic_0001>
module attributes {stable_mosaic.version = 11 : i64} {
  func.func @nafblock_kernel(%arg0: i32, %arg1: memref<1x4x256xf32, #tpu.memory_space<vmem>>, %arg2: memref<4x256xf32, #tpu.memory_space<vmem>>, %arg3: memref<8x4xf32, #tpu.memory_space<vmem>>, %arg4: memref<4x4xf32, #tpu.memory_space<vmem>>, %arg5: memref<4x4xf32, #tpu.memory_space<vmem>>, %arg6: memref<8x4xf32, #tpu.memory_space<vmem>>, %arg7: memref<4x4xf32, #tpu.memory_space<vmem>>, %arg8: memref<4x3xf32, #tpu.memory_space<vmem>>, %arg9: memref<8x12xf32, #tpu.memory_space<vmem>>, %arg10: memref<1x4x256xf32, #tpu.memory_space<vmem>>) attributes {dimension_semantics = [#tpu.dimension_semantics<parallel>], iteration_bounds = array<i64: 2>, scalar_prefetch = 0 : i64, scratch_operands = 0 : i64, tpu.core_type = #tpu.core_type<tc>, window_params = [{transform_indices = @transform_0, window_bounds = array<i64: 1, 4, 256>}, {pipeline_mode = #tpu.pipeline_mode<synchronous>, transform_indices = @transform_1, window_bounds = array<i64: 4, 256>}, {pipeline_mode = #tpu.pipeline_mode<synchronous>, transform_indices = @transform_2, window_bounds = array<i64: 8, 4>}, {pipeline_mode = #tpu.pipeline_mode<synchronous>, transform_indices = @transform_3, window_bounds = array<i64: 4, 4>}, {pipeline_mode = #tpu.pipeline_mode<synchronous>, transform_indices = @transform_4, window_bounds = array<i64: 4, 4>}, {pipeline_mode = #tpu.pipeline_mode<synchronous>, transform_indices = @transform_5, window_bounds = array<i64: 8, 4>}, {pipeline_mode = #tpu.pipeline_mode<synchronous>, transform_indices = @transform_6, window_bounds = array<i64: 4, 4>}, {pipeline_mode = #tpu.pipeline_mode<synchronous>, transform_indices = @transform_7, window_bounds = array<i64: 4, 3>}, {pipeline_mode = #tpu.pipeline_mode<synchronous>, transform_indices = @transform_8, window_bounds = array<i64: 8, 12>}, {transform_indices = @transform_9, window_bounds = array<i64: 1, 4, 256>}]} {
    %c0 = arith.constant 0 : index
    %c0_0 = arith.constant 0 : index
    %c0_1 = arith.constant 0 : index
    %0 = vector.load %arg1[%c0, %c0_0, %c0_1] : memref<1x4x256xf32, #tpu.memory_space<vmem>>, vector<1x4x256xf32>
    %1 = vector.shape_cast %0 : vector<1x4x256xf32> to vector<4x256xf32>
    %c0_2 = arith.constant 0 : index
    %c0_3 = arith.constant 0 : index
    %2 = vector.load %arg8[%c0_2, %c0_3] : memref<4x3xf32, #tpu.memory_space<vmem>>, vector<4x3xf32>
    %c0_4 = arith.constant 0 : index
    %c0_5 = arith.constant 0 : index
    %3 = vector.load %arg9[%c0_4, %c0_5] : memref<8x12xf32, #tpu.memory_space<vmem>>, vector<8x12xf32>
    %c0_6 = arith.constant 0 : index
    %c0_7 = arith.constant 0 : index
    %4 = vector.load %arg2[%c0_6, %c0_7] : memref<4x256xf32, #tpu.memory_space<vmem>>, vector<4x256xf32>
    %5 = vector.extract_strided_slice %2 {offsets = [0, 0], sizes = [4, 1], strides = [1, 1]} : vector<4x3xf32> to vector<4x1xf32>
    %6 = vector.extract_strided_slice %2 {offsets = [0, 1], sizes = [4, 1], strides = [1, 1]} : vector<4x3xf32> to vector<4x1xf32>
    %7 = vector.extract_strided_slice %2 {offsets = [0, 2], sizes = [4, 1], strides = [1, 1]} : vector<4x3xf32> to vector<4x1xf32>
    %8 = vector.extract_strided_slice %3 {offsets = [0, 9], sizes = [8, 1], strides = [1, 1]} : vector<8x12xf32> to vector<8x1xf32>
    %9 = vector.extract_strided_slice %3 {offsets = [0, 10], sizes = [8, 1], strides = [1, 1]} : vector<8x12xf32> to vector<8x1xf32>
    %10 = vector.extract_strided_slice %3 {offsets = [0, 11], sizes = [8, 1], strides = [1, 1]} : vector<8x12xf32> to vector<8x1xf32>
    %11 = vector.extract_strided_slice %4 {offsets = [0, 0], sizes = [1, 256], strides = [1, 1]} : vector<4x256xf32> to vector<1x256xf32>
    %12 = vector.extract_strided_slice %4 {offsets = [1, 0], sizes = [1, 256], strides = [1, 1]} : vector<4x256xf32> to vector<1x256xf32>
    %13 = vector.extract_strided_slice %4 {offsets = [2, 0], sizes = [1, 256], strides = [1, 1]} : vector<4x256xf32> to vector<1x256xf32>
    %14 = vector.extract_strided_slice %4 {offsets = [3, 0], sizes = [1, 256], strides = [1, 1]} : vector<4x256xf32> to vector<1x256xf32>
    %cst = arith.constant dense<0.000000e+00> : vector<256xf32>
    %15 = vector.multi_reduction <add>, %1, %cst [0] : vector<4x256xf32> to vector<256xf32>
    %16 = vector.shape_cast %15 : vector<256xf32> to vector<1x256xf32>
    %cst_8 = arith.constant 4.000000e+00 : f32
    %17 = vector.broadcast %cst_8 : f32 to vector<1x256xf32>
    %18 = arith.divf %16, %17 : vector<1x256xf32>
    %19 = vector.broadcast %18 : vector<1x256xf32> to vector<4x256xf32>
    %20 = arith.subf %1, %19 : vector<4x256xf32>
    %21 = arith.mulf %20, %20 : vector<4x256xf32>
    %cst_9 = arith.constant dense<0.000000e+00> : vector<256xf32>
    %22 = vector.multi_reduction <add>, %21, %cst_9 [0] : vector<4x256xf32> to vector<256xf32>
    %23 = vector.shape_cast %22 : vector<256xf32> to vector<1x256xf32>
    %cst_10 = arith.constant 4.000000e+00 : f32
    %24 = vector.broadcast %cst_10 : f32 to vector<1x256xf32>
    %25 = arith.divf %23, %24 : vector<1x256xf32>
    %26 = vector.broadcast %18 : vector<1x256xf32> to vector<4x256xf32>
    %27 = arith.subf %1, %26 : vector<4x256xf32>
    %cst_11 = arith.constant 9.99999997E-7 : f32
    %28 = vector.broadcast %cst_11 : f32 to vector<1x256xf32>
    %29 = arith.addf %25, %28 : vector<1x256xf32>
    %30 = math.rsqrt %29 : vector<1x256xf32>
    %31 = vector.broadcast %30 : vector<1x256xf32> to vector<4x256xf32>
    %32 = arith.mulf %27, %31 : vector<4x256xf32>
    %c0_12 = arith.constant 0 : index
    %c0_13 = arith.constant 0 : index
    %33 = vector.load %arg3[%c0_12, %c0_13] : memref<8x4xf32, #tpu.memory_space<vmem>>, vector<8x4xf32>
    %cst_14 = arith.constant dense<0.000000e+00> : vector<8x256xf32>
    %34 = tpu.matmul %33, %32, %cst_14 {dimension_numbers = #tpu.dot_dimension_numbers<[1], [0], [0], [1], [0, 0, 1, 1], [], []>} : vector<8x4xf32>, vector<4x256xf32>, vector<8x256xf32> -> vector<8x256xf32>
    %35 = vector.broadcast %8 : vector<8x1xf32> to vector<8x256xf32>
    %36 = arith.addf %34, %35 : vector<8x256xf32>
    %c16_i32 = arith.constant 16 : i32
    %37 = tpu.dynamic_rotate %36 by %c16_i32 dim 1 : vector<8x256xf32>, i32 -> vector<8x256xf32>
    %38 = vector.broadcast %11 : vector<1x256xf32> to vector<8x256xf32>
    %39 = arith.mulf %37, %38 : vector<8x256xf32>
    %c1_i32 = arith.constant 1 : i32
    %40 = tpu.dynamic_rotate %39 by %c1_i32 dim 1 : vector<8x256xf32>, i32 -> vector<8x256xf32>
    %41 = vector.broadcast %13 : vector<1x256xf32> to vector<8x256xf32>
    %42 = arith.mulf %40, %41 : vector<8x256xf32>
    %43 = vector.extract_strided_slice %3 {offsets = [0, 0], sizes = [8, 1], strides = [1, 1]} : vector<8x12xf32> to vector<8x1xf32>
    %44 = vector.broadcast %43 : vector<8x1xf32> to vector<8x256xf32>
    %45 = arith.mulf %42, %44 : vector<8x256xf32>
    %46 = vector.extract_strided_slice %3 {offsets = [0, 1], sizes = [8, 1], strides = [1, 1]} : vector<8x12xf32> to vector<8x1xf32>
    %47 = vector.broadcast %46 : vector<8x1xf32> to vector<8x256xf32>
    %48 = arith.mulf %39, %47 : vector<8x256xf32>
    %49 = arith.addf %45, %48 : vector<8x256xf32>
    %c255_i32 = arith.constant 255 : i32
    %50 = tpu.dynamic_rotate %39 by %c255_i32 dim 1 : vector<8x256xf32>, i32 -> vector<8x256xf32>
    %51 = vector.broadcast %14 : vector<1x256xf32> to vector<8x256xf32>
    %52 = arith.mulf %50, %51 : vector<8x256xf32>
    %53 = vector.extract_strided_slice %3 {offsets = [0, 2], sizes = [8, 1], strides = [1, 1]} : vector<8x12xf32> to vector<8x1xf32>
    %54 = vector.broadcast %53 : vector<8x1xf32> to vector<8x256xf32>
    %55 = arith.mulf %52, %54 : vector<8x256xf32>
    %56 = arith.addf %49, %55 : vector<8x256xf32>
    %c1_i32_15 = arith.constant 1 : i32
    %57 = tpu.dynamic_rotate %36 by %c1_i32_15 dim 1 : vector<8x256xf32>, i32 -> vector<8x256xf32>
    %58 = vector.broadcast %13 : vector<1x256xf32> to vector<8x256xf32>
    %59 = arith.mulf %57, %58 : vector<8x256xf32>
    %60 = vector.extract_strided_slice %3 {offsets = [0, 3], sizes = [8, 1], strides = [1, 1]} : vector<8x12xf32> to vector<8x1xf32>
    %61 = vector.broadcast %60 : vector<8x1xf32> to vector<8x256xf32>
    %62 = arith.mulf %59, %61 : vector<8x256xf32>
    %63 = arith.addf %56, %62 : vector<8x256xf32>
    %64 = vector.extract_strided_slice %3 {offsets = [0, 4], sizes = [8, 1], strides = [1, 1]} : vector<8x12xf32> to vector<8x1xf32>
    %65 = vector.broadcast %64 : vector<8x1xf32> to vector<8x256xf32>
    %66 = arith.mulf %36, %65 : vector<8x256xf32>
    %67 = arith.addf %63, %66 : vector<8x256xf32>
    %c255_i32_16 = arith.constant 255 : i32
    %68 = tpu.dynamic_rotate %36 by %c255_i32_16 dim 1 : vector<8x256xf32>, i32 -> vector<8x256xf32>
    %69 = vector.broadcast %14 : vector<1x256xf32> to vector<8x256xf32>
    %70 = arith.mulf %68, %69 : vector<8x256xf32>
    %71 = vector.extract_strided_slice %3 {offsets = [0, 5], sizes = [8, 1], strides = [1, 1]} : vector<8x12xf32> to vector<8x1xf32>
    %72 = vector.broadcast %71 : vector<8x1xf32> to vector<8x256xf32>
    %73 = arith.mulf %70, %72 : vector<8x256xf32>
    %74 = arith.addf %67, %73 : vector<8x256xf32>
    %c240_i32 = arith.constant 240 : i32
    %75 = tpu.dynamic_rotate %36 by %c240_i32 dim 1 : vector<8x256xf32>, i32 -> vector<8x256xf32>
    %76 = vector.broadcast %12 : vector<1x256xf32> to vector<8x256xf32>
    %77 = arith.mulf %75, %76 : vector<8x256xf32>
    %c1_i32_17 = arith.constant 1 : i32
    %78 = tpu.dynamic_rotate %77 by %c1_i32_17 dim 1 : vector<8x256xf32>, i32 -> vector<8x256xf32>
    %79 = vector.broadcast %13 : vector<1x256xf32> to vector<8x256xf32>
    %80 = arith.mulf %78, %79 : vector<8x256xf32>
    %81 = vector.extract_strided_slice %3 {offsets = [0, 6], sizes = [8, 1], strides = [1, 1]} : vector<8x12xf32> to vector<8x1xf32>
    %82 = vector.broadcast %81 : vector<8x1xf32> to vector<8x256xf32>
    %83 = arith.mulf %80, %82 : vector<8x256xf32>
    %84 = arith.addf %74, %83 : vector<8x256xf32>
    %85 = vector.extract_strided_slice %3 {offsets = [0, 7], sizes = [8, 1], strides = [1, 1]} : vector<8x12xf32> to vector<8x1xf32>
    %86 = vector.broadcast %85 : vector<8x1xf32> to vector<8x256xf32>
    %87 = arith.mulf %77, %86 : vector<8x256xf32>
    %88 = arith.addf %84, %87 : vector<8x256xf32>
    %c255_i32_18 = arith.constant 255 : i32
    %89 = tpu.dynamic_rotate %77 by %c255_i32_18 dim 1 : vector<8x256xf32>, i32 -> vector<8x256xf32>
    %90 = vector.broadcast %14 : vector<1x256xf32> to vector<8x256xf32>
    %91 = arith.mulf %89, %90 : vector<8x256xf32>
    %92 = vector.extract_strided_slice %3 {offsets = [0, 8], sizes = [8, 1], strides = [1, 1]} : vector<8x12xf32> to vector<8x1xf32>
    %93 = vector.broadcast %92 : vector<8x1xf32> to vector<8x256xf32>
    %94 = arith.mulf %91, %93 : vector<8x256xf32>
    %95 = arith.addf %88, %94 : vector<8x256xf32>
    %96 = vector.broadcast %9 : vector<8x1xf32> to vector<8x256xf32>
    %97 = arith.addf %95, %96 : vector<8x256xf32>
    %98 = vector.extract_strided_slice %97 {offsets = [0, 0], sizes = [4, 256], strides = [1, 1]} : vector<8x256xf32> to vector<4x256xf32>
    %99 = vector.extract_strided_slice %97 {offsets = [4, 0], sizes = [4, 256], strides = [1, 1]} : vector<8x256xf32> to vector<4x256xf32>
    %100 = arith.mulf %98, %99 : vector<4x256xf32>
    %cst_19 = arith.constant dense<0.000000e+00> : vector<4xf32>
    %101 = vector.multi_reduction <add>, %100, %cst_19 [1] : vector<4x256xf32> to vector<4xf32>
    %102 = vector.shape_cast %101 : vector<4xf32> to vector<4x1xf32>
    %cst_20 = arith.constant 2.560000e+02 : f32
    %103 = vector.broadcast %cst_20 : f32 to vector<4x1xf32>
    %104 = arith.divf %102, %103 : vector<4x1xf32>
    %c0_21 = arith.constant 0 : index
    %c0_22 = arith.constant 0 : index
    %105 = vector.load %arg4[%c0_21, %c0_22] : memref<4x4xf32, #tpu.memory_space<vmem>>, vector<4x4xf32>
    %cst_23 = arith.constant dense<0.000000e+00> : vector<4x1xf32>
    %106 = tpu.matmul %105, %104, %cst_23 {dimension_numbers = #tpu.dot_dimension_numbers<[1], [0], [0], [1], [0, 0, 1, 1], [], []>} : vector<4x4xf32>, vector<4x1xf32>, vector<4x1xf32> -> vector<4x1xf32>
    %107 = arith.addf %106, %5 : vector<4x1xf32>
    %108 = vector.broadcast %107 : vector<4x1xf32> to vector<4x256xf32>
    %109 = arith.mulf %100, %108 : vector<4x256xf32>
    %c0_24 = arith.constant 0 : index
    %c0_25 = arith.constant 0 : index
    %110 = vector.load %arg5[%c0_24, %c0_25] : memref<4x4xf32, #tpu.memory_space<vmem>>, vector<4x4xf32>
    %cst_26 = arith.constant dense<0.000000e+00> : vector<4x256xf32>
    %111 = tpu.matmul %110, %109, %cst_26 {dimension_numbers = #tpu.dot_dimension_numbers<[1], [0], [0], [1], [0, 0, 1, 1], [], []>} : vector<4x4xf32>, vector<4x256xf32>, vector<4x256xf32> -> vector<4x256xf32>
    %112 = arith.addf %1, %111 : vector<4x256xf32>
    %113 = vector.broadcast %6 : vector<4x1xf32> to vector<4x256xf32>
    %114 = arith.addf %112, %113 : vector<4x256xf32>
    %cst_27 = arith.constant dense<0.000000e+00> : vector<256xf32>
    %115 = vector.multi_reduction <add>, %114, %cst_27 [0] : vector<4x256xf32> to vector<256xf32>
    %116 = vector.shape_cast %115 : vector<256xf32> to vector<1x256xf32>
    %cst_28 = arith.constant 4.000000e+00 : f32
    %117 = vector.broadcast %cst_28 : f32 to vector<1x256xf32>
    %118 = arith.divf %116, %117 : vector<1x256xf32>
    %119 = vector.broadcast %118 : vector<1x256xf32> to vector<4x256xf32>
    %120 = arith.subf %114, %119 : vector<4x256xf32>
    %121 = arith.mulf %120, %120 : vector<4x256xf32>
    %cst_29 = arith.constant dense<0.000000e+00> : vector<256xf32>
    %122 = vector.multi_reduction <add>, %121, %cst_29 [0] : vector<4x256xf32> to vector<256xf32>
    %123 = vector.shape_cast %122 : vector<256xf32> to vector<1x256xf32>
    %cst_30 = arith.constant 4.000000e+00 : f32
    %124 = vector.broadcast %cst_30 : f32 to vector<1x256xf32>
    %125 = arith.divf %123, %124 : vector<1x256xf32>
    %126 = vector.broadcast %118 : vector<1x256xf32> to vector<4x256xf32>
    %127 = arith.subf %114, %126 : vector<4x256xf32>
    %cst_31 = arith.constant 9.99999997E-7 : f32
    %128 = vector.broadcast %cst_31 : f32 to vector<1x256xf32>
    %129 = arith.addf %125, %128 : vector<1x256xf32>
    %130 = math.rsqrt %129 : vector<1x256xf32>
    %131 = vector.broadcast %130 : vector<1x256xf32> to vector<4x256xf32>
    %132 = arith.mulf %127, %131 : vector<4x256xf32>
    %c0_32 = arith.constant 0 : index
    %c0_33 = arith.constant 0 : index
    %133 = vector.load %arg6[%c0_32, %c0_33] : memref<8x4xf32, #tpu.memory_space<vmem>>, vector<8x4xf32>
    %cst_34 = arith.constant dense<0.000000e+00> : vector<8x256xf32>
    %134 = tpu.matmul %133, %132, %cst_34 {dimension_numbers = #tpu.dot_dimension_numbers<[1], [0], [0], [1], [0, 0, 1, 1], [], []>} : vector<8x4xf32>, vector<4x256xf32>, vector<8x256xf32> -> vector<8x256xf32>
    %135 = vector.broadcast %10 : vector<8x1xf32> to vector<8x256xf32>
    %136 = arith.addf %134, %135 : vector<8x256xf32>
    %137 = vector.extract_strided_slice %136 {offsets = [0, 0], sizes = [4, 256], strides = [1, 1]} : vector<8x256xf32> to vector<4x256xf32>
    %138 = vector.extract_strided_slice %136 {offsets = [4, 0], sizes = [4, 256], strides = [1, 1]} : vector<8x256xf32> to vector<4x256xf32>
    %139 = arith.mulf %137, %138 : vector<4x256xf32>
    %c0_35 = arith.constant 0 : index
    %c0_36 = arith.constant 0 : index
    %140 = vector.load %arg7[%c0_35, %c0_36] : memref<4x4xf32, #tpu.memory_space<vmem>>, vector<4x4xf32>
    %cst_37 = arith.constant dense<0.000000e+00> : vector<4x256xf32>
    %141 = tpu.matmul %140, %139, %cst_37 {dimension_numbers = #tpu.dot_dimension_numbers<[1], [0], [0], [1], [0, 0, 1, 1], [], []>} : vector<4x4xf32>, vector<4x256xf32>, vector<4x256xf32> -> vector<4x256xf32>
    %142 = arith.addf %114, %141 : vector<4x256xf32>
    %143 = vector.broadcast %7 : vector<4x1xf32> to vector<4x256xf32>
    %144 = arith.addf %142, %143 : vector<4x256xf32>
    %c0_38 = arith.constant 0 : index
    %c0_39 = arith.constant 0 : index
    %c0_40 = arith.constant 0 : index
    %145 = vector.load %arg10[%c0_38, %c0_39, %c0_40] : memref<1x4x256xf32, #tpu.memory_space<vmem>>, vector<1x4x256xf32>
    %146 = vector.shape_cast %145 : vector<1x4x256xf32> to vector<4x256xf32>
    %147 = vector.shape_cast %144 : vector<4x256xf32> to vector<1x4x256xf32>
    tpu.vector_store %arg10[%c0_38, %c0_39, %c0_40], %147 {strides = array<i32>} : memref<1x4x256xf32, #tpu.memory_space<vmem>>, vector<1x4x256xf32>,
    return
  }
  func.func @transform_0(%arg0: i32) -> (i32, i32, i32) {
    %c0_i32 = arith.constant 0 : i32
    %c0_i32_0 = arith.constant 0 : i32
    %c0_i32_1 = arith.constant 0 : i32
    return %arg0, %c0_i32, %c0_i32_0 : i32, i32, i32
  }
  func.func @transform_1(%arg0: i32) -> (i32, i32) {
    %c0_i32 = arith.constant 0 : i32
    %c0_i32_0 = arith.constant 0 : i32
    %c0_i32_1 = arith.constant 0 : i32
    return %c0_i32, %c0_i32_0 : i32, i32
  }
  func.func @transform_2(%arg0: i32) -> (i32, i32) {
    %c0_i32 = arith.constant 0 : i32
    %c0_i32_0 = arith.constant 0 : i32
    %c0_i32_1 = arith.constant 0 : i32
    return %c0_i32, %c0_i32_0 : i32, i32
  }
  func.func @transform_3(%arg0: i32) -> (i32, i32) {
    %c0_i32 = arith.constant 0 : i32
    %c0_i32_0 = arith.constant 0 : i32
    %c0_i32_1 = arith.constant 0 : i32
    return %c0_i32, %c0_i32_0 : i32, i32
  }
  func.func @transform_4(%arg0: i32) -> (i32, i32) {
    %c0_i32 = arith.constant 0 : i32
    %c0_i32_0 = arith.constant 0 : i32
    %c0_i32_1 = arith.constant 0 : i32
    return %c0_i32, %c0_i32_0 : i32, i32
  }
  func.func @transform_5(%arg0: i32) -> (i32, i32) {
    %c0_i32 = arith.constant 0 : i32
    %c0_i32_0 = arith.constant 0 : i32
    %c0_i32_1 = arith.constant 0 : i32
    return %c0_i32, %c0_i32_0 : i32, i32
  }
  func.func @transform_6(%arg0: i32) -> (i32, i32) {
    %c0_i32 = arith.constant 0 : i32
    %c0_i32_0 = arith.constant 0 : i32
    %c0_i32_1 = arith.constant 0 : i32
    return %c0_i32, %c0_i32_0 : i32, i32
  }
  func.func @transform_7(%arg0: i32) -> (i32, i32) {
    %c0_i32 = arith.constant 0 : i32
    %c0_i32_0 = arith.constant 0 : i32
    %c0_i32_1 = arith.constant 0 : i32
    return %c0_i32, %c0_i32_0 : i32, i32
  }
  func.func @transform_8(%arg0: i32) -> (i32, i32) {
    %c0_i32 = arith.constant 0 : i32
    %c0_i32_0 = arith.constant 0 : i32
    %c0_i32_1 = arith.constant 0 : i32
    return %c0_i32, %c0_i32_0 : i32, i32
  }
  func.func @transform_9(%arg0: i32) -> (i32, i32, i32) {
    %c0_i32 = arith.constant 0 : i32
    %c0_i32_0 = arith.constant 0 : i32
    %c0_i32_1 = arith.constant 0 : i32
    return %arg0, %c0_i32, %c0_i32_0 : i32, i32, i32
  }
}

</mosaic_0001>

<llo_original>
// kernel: nafblock_pallas.1
$region0: #{nafblock_pallas.1}
  #allocation0 [shape = 'u32[]', space=smem, size = 0x4, offset = 0x4, fixed_abs, tag = 'smem constant byte address 0x4 - core index']
  #allocation1 [shape = 'u32[72,128]{1,0:T(1,128)}', space=vmem, size = 0x9000, scoped, tag = 'internal scratch']
  %s0 = inlined_call_operand.vmem [shape: f32[2,4,256], index: 0, kind: input, shape index: {}]
  %s1 = inlined_call_operand.vmem [shape: f32[4,256], index: 1, kind: input, shape index: {}]
  %s2 = inlined_call_operand.vmem [shape: f32[8,4], index: 2, kind: input, shape index: {}]
  %s3 = inlined_call_operand.vmem [shape: f32[4,4], index: 3, kind: input, shape index: {}]
  %s4 = inlined_call_operand.vmem [shape: f32[4,4], index: 4, kind: input, shape index: {}]
  %s5 = inlined_call_operand.vmem [shape: f32[8,4], index: 5, kind: input, shape index: {}]
  %s6 = inlined_call_operand.vmem [shape: f32[4,4], index: 6, kind: input, shape index: {}]
  %s7 = inlined_call_operand.vmem [shape: f32[4,3], index: 7, kind: input, shape index: {}]
  %s8 = inlined_call_operand.vmem [shape: f32[8,12], index: 8, kind: input, shape index: {}]
  %s9 = inlined_call_operand.vmem [shape: f32[2,4,256], index: 9, kind: output, shape index: {}]
  %s10 = sld [smem:[#allocation0]]
  $region69: #{nafblock_pallas.1} parent=0
    _
  %s12 = ssub.s32 1, %s10
  %s13 = scalar_select 0, %s12, %s10
  loop: start=0, step=1, limit=4
  $region2: #{nafblock_pallas.1} parent=0 // loop_pre_header
    _
  $region3: #{nafblock_pallas.1} parent=0 // loop_header
    %s15 = sphi 0, %s19
    %p16 = scmp.ge.s32.totalorder %s15, 4
    %s25 = sphi 0, %s27
    %s28 = sphi 0, %s25
    %s29 = sphi 0, %s28
    %s45 = sphi 0, %s29
    %s49 = sphi 0, %s49
    %s51 = sphi 0, %s49
    %s52 = sphi 0, %s51
    %s66 = sphi 0, %s52
    %s70 = sphi 0, %s70
    %s72 = sphi 0, %s70
    %s73 = sphi 0, %s72
    %s87 = sphi 0, %s73
    %s91 = sphi 0, %s91
    %s93 = sphi 0, %s91
    %s94 = sphi 0, %s93
    %s108 = sphi 0, %s94
    %s112 = sphi 0, %s112
    %s114 = sphi 0, %s112
    %s115 = sphi 0, %s114
    %s129 = sphi 0, %s115
    %s133 = sphi 0, %s133
    %s135 = sphi 0, %s133
    %s136 = sphi 0, %s135
    %s150 = sphi 0, %s136
    %s154 = sphi 0, %s154
    %s156 = sphi 0, %s154
    %s157 = sphi 0, %s156
    %s171 = sphi 0, %s157
    %s175 = sphi 0, %s175
    %s177 = sphi 0, %s175
    %s178 = sphi 0, %s177
    %s192 = sphi 0, %s178
    %s196 = sphi 0, %s196
    %s198 = sphi 0, %s196
    %s199 = sphi 0, %s198
    %s213 = sphi 0, %s199
    %s219 = sphi 0, %s221
    %s222 = sphi 0, %s219
    %s223 = sphi 0, %s222
    %s239 = sphi 0, %s223
  $region4: #{nafblock_pallas.1} parent=0 // loop_header_branch
    %18 = sbr.rel (%p16) target = $region8
  $region5: #{nafblock_pallas.1} parent=0 // loop_body
    %s20 = ssub.s32 %s15, 1
    %s21 = ssub.s32 %s15, 2
    %s22 = sadd.s32 %s15, 1
    %s23 = ssub.s32 %s15, %s22
    %p24 = scmp.eq.s32.totalorder %s23, 0
    %s26 = sadd.s32 %s25, 1
    %s27 = scalar_select %p24, %s25, %s26
    %p30 = pneg %p24
    %p31 = scmp.eq.s32.totalorder %s15, 1
    %p32 = por %p30, %p31
    %p33 = scmp.ne.s32.totalorder %s25, %s28
    %p34 = scmp.eq.s32.totalorder %s15, 0
    %p35 = por %p33, %p34
    %p36 = scmp.ne.s32.totalorder %s25, %s28
    %p37 = scmp.eq.s32.totalorder %s20, 1
    %p38 = por %p36, %p37
    %p39 = scmp.ne.s32.totalorder %s28, %s29
    %p40 = scmp.eq.s32.totalorder %s20, 0
    %p41 = por %p39, %p40
    %p42 = scmp.ne.s32.totalorder %s28, %s29
    %p43 = scmp.eq.s32.totalorder %s21, 1
    %p44 = por %p42, %p43
    %p46 = scmp.ne.s32.totalorder %s29, %s45
    %p47 = scmp.eq.s32.totalorder %s21, 0
    %p48 = por %p46, %p47
    %s50 = sadd.s32 %s49, 1
    %p53 = scmp.eq.s32.totalorder %s15, 1
    %p54 = scmp.ne.s32.totalorder %s49, %s51
    %p55 = scmp.eq.s32.totalorder %s15, 0
    %p56 = por %p54, %p55
    %p57 = scmp.ne.s32.totalorder %s49, %s51
    %p58 = scmp.eq.s32.totalorder %s20, 1
    %p59 = por %p57, %p58
    %p60 = scmp.ne.s32.totalorder %s51, %s52
    %p61 = scmp.eq.s32.totalorder %s20, 0
    %p62 = por %p60, %p61
    %p63 = scmp.ne.s32.totalorder %s51, %s52
    %p64 = scmp.eq.s32.totalorder %s21, 1
    %p65 = por %p63, %p64
    %p67 = scmp.ne.s32.totalorder %s52, %s66
    %p68 = scmp.eq.s32.totalorder %s21, 0
    %p69 = por %p67, %p68
    %s71 = sadd.s32 %s70, 1
    %p74 = scmp.eq.s32.totalorder %s15, 1
    %p75 = scmp.ne.s32.totalorder %s70, %s72
    %p76 = scmp.eq.s32.totalorder %s15, 0
    %p77 = por %p75, %p76
    %p78 = scmp.ne.s32.totalorder %s70, %s72
    %p79 = scmp.eq.s32.totalorder %s20, 1
    %p80 = por %p78, %p79
    %p81 = scmp.ne.s32.totalorder %s72, %s73
    %p82 = scmp.eq.s32.totalorder %s20, 0
    %p83 = por %p81, %p82
    %p84 = scmp.ne.s32.totalorder %s72, %s73
    %p85 = scmp.eq.s32.totalorder %s21, 1
    %p86 = por %p84, %p85
    %p88 = scmp.ne.s32.totalorder %s73, %s87
    %p89 = scmp.eq.s32.totalorder %s21, 0
    %p90 = por %p88, %p89
    %s92 = sadd.s32 %s91, 1
    %p95 = scmp.eq.s32.totalorder %s15, 1
    %p96 = scmp.ne.s32.totalorder %s91, %s93
    %p97 = scmp.eq.s32.totalorder %s15, 0
    %p98 = por %p96, %p97
    %p99 = scmp.ne.s32.totalorder %s91, %s93
    %p100 = scmp.eq.s32.totalorder %s20, 1
    %p101 = por %p99, %p100
    %p102 = scmp.ne.s32.totalorder %s93, %s94
    %p103 = scmp.eq.s32.totalorder %s20, 0
    %p104 = por %p102, %p103
    %p105 = scmp.ne.s32.totalorder %s93, %s94
    %p106 = scmp.eq.s32.totalorder %s21, 1
    %p107 = por %p105, %p106
    %p109 = scmp.ne.s32.totalorder %s94, %s108
    %p110 = scmp.eq.s32.totalorder %s21, 0
    %p111 = por %p109, %p110
    %s113 = sadd.s32 %s112, 1
    %p116 = scmp.eq.s32.totalorder %s15, 1
    %p117 = scmp.ne.s32.totalorder %s112, %s114
    %p118 = scmp.eq.s32.totalorder %s15, 0
    %p119 = por %p117, %p118
    %p120 = scmp.ne.s32.totalorder %s112, %s114
    %p121 = scmp.eq.s32.totalorder %s20, 1
    %p122 = por %p120, %p121
    %p123 = scmp.ne.s32.totalorder %s114, %s115
    %p124 = scmp.eq.s32.totalorder %s20, 0
    %p125 = por %p123, %p124
    %p126 = scmp.ne.s32.totalorder %s114, %s115
    %p127 = scmp.eq.s32.totalorder %s21, 1
    %p128 = por %p126, %p127
    %p130 = scmp.ne.s32.totalorder %s115, %s129
    %p131 = scmp.eq.s32.totalorder %s21, 0
    %p132 = por %p130, %p131
    %s134 = sadd.s32 %s133, 1
    %p137 = scmp.eq.s32.totalorder %s15, 1
    %p138 = scmp.ne.s32.totalorder %s133, %s135
    %p139 = scmp.eq.s32.totalorder %s15, 0
    %p140 = por %p138, %p139
    %p141 = scmp.ne.s32.totalorder %s133, %s135
    %p142 = scmp.eq.s32.totalorder %s20, 1
    %p143 = por %p141, %p142
    %p144 = scmp.ne.s32.totalorder %s135, %s136
    %p145 = scmp.eq.s32.totalorder %s20, 0
    %p146 = por %p144, %p145
    %p147 = scmp.ne.s32.totalorder %s135, %s136
    %p148 = scmp.eq.s32.totalorder %s21, 1
    %p149 = por %p147, %p148
    %p151 = scmp.ne.s32.totalorder %s136, %s150
    %p152 = scmp.eq.s32.totalorder %s21, 0
    %p153 = por %p151, %p152
    %s155 = sadd.s32 %s154, 1
    %p158 = scmp.eq.s32.totalorder %s15, 1
    %p159 = scmp.ne.s32.totalorder %s154, %s156
    %p160 = scmp.eq.s32.totalorder %s15, 0
    %p161 = por %p159, %p160
    %p162 = scmp.ne.s32.totalorder %s154, %s156
    %p163 = scmp.eq.s32.totalorder %s20, 1
    %p164 = por %p162, %p163
    %p165 = scmp.ne.s32.totalorder %s156, %s157
    %p166 = scmp.eq.s32.totalorder %s20, 0
    %p167 = por %p165, %p166
    %p168 = scmp.ne.s32.totalorder %s156, %s157
    %p169 = scmp.eq.s32.totalorder %s21, 1
    %p170 = por %p168, %p169
    %p172 = scmp.ne.s32.totalorder %s157, %s171
    %p173 = scmp.eq.s32.totalorder %s21, 0
    %p174 = por %p172, %p173
    %s176 = sadd.s32 %s175, 1
    %p179 = scmp.eq.s32.totalorder %s15, 1
    %p180 = scmp.ne.s32.totalorder %s175, %s177
    %p181 = scmp.eq.s32.totalorder %s15, 0
    %p182 = por %p180, %p181
    %p183 = scmp.ne.s32.totalorder %s175, %s177
    %p184 = scmp.eq.s32.totalorder %s20, 1
    %p185 = por %p183, %p184
    %p186 = scmp.ne.s32.totalorder %s177, %s178
    %p187 = scmp.eq.s32.totalorder %s20, 0
    %p188 = por %p186, %p187
    %p189 = scmp.ne.s32.totalorder %s177, %s178
    %p190 = scmp.eq.s32.totalorder %s21, 1
    %p191 = por %p189, %p190
    %p193 = scmp.ne.s32.totalorder %s178, %s192
    %p194 = scmp.eq.s32.totalorder %s21, 0
    %p195 = por %p193, %p194
    %s197 = sadd.s32 %s196, 1
    %p200 = scmp.eq.s32.totalorder %s15, 1
    %p201 = scmp.ne.s32.totalorder %s196, %s198
    %p202 = scmp.eq.s32.totalorder %s15, 0
    %p203 = por %p201, %p202
    %p204 = scmp.ne.s32.totalorder %s196, %s198
    %p205 = scmp.eq.s32.totalorder %s20, 1
    %p206 = por %p204, %p205
    %p207 = scmp.ne.s32.totalorder %s198, %s199
    %p208 = scmp.eq.s32.totalorder %s20, 0
    %p209 = por %p207, %p208
    %p210 = scmp.ne.s32.totalorder %s198, %s199
    %p211 = scmp.eq.s32.totalorder %s21, 1
    %p212 = por %p210, %p211
    %p214 = scmp.ne.s32.totalorder %s199, %s213
    %p215 = scmp.eq.s32.totalorder %s21, 0
    %p216 = por %p214, %p215
    %s217 = ssub.s32 %s15, %s22
    %p218 = scmp.eq.s32.totalorder %s217, 0
    %s220 = sadd.s32 %s219, 1
    %s221 = scalar_select %p218, %s219, %s220
    %p224 = pneg %p218
    %p225 = scmp.eq.s32.totalorder %s15, 1
    %p226 = por %p224, %p225
    %p227 = scmp.ne.s32.totalorder %s219, %s222
    %p228 = scmp.eq.s32.totalorder %s15, 0
    %p229 = por %p227, %p228
    %p230 = scmp.ne.s32.totalorder %s219, %s222
    %p231 = scmp.eq.s32.totalorder %s20, 1
    %p232 = por %p230, %p231
    %p233 = scmp.ne.s32.totalorder %s222, %s223
    %p234 = scmp.eq.s32.totalorder %s20, 0
    %p235 = por %p233, %p234
    %p236 = scmp.ne.s32.totalorder %s222, %s223
    %p237 = scmp.eq.s32.totalorder %s21, 1
    %p238 = por %p236, %p237
    %p240 = scmp.ne.s32.totalorder %s223, %s239
    %p241 = scmp.eq.s32.totalorder %s21, 0
    %p242 = por %p240, %p241
    %p243 = scmp.le.s32.totalorder 1, %s15
    %p244 = scmp.lt.s32.totalorder %s15, 3
    %p245 = pnand %p243, %p244
    %p246 = pneg %p245
    // Predicated region
    $region9: #{nafblock_pallas.1} parent=5 // pred_check
      _
    $region10: #{nafblock_pallas.1} parent=5 // pred_check_branch
      %248 = sbr.rel (%p245) target = $region12
    $region11: #{nafblock_pallas.1} parent=5 // pred_region
      %s249 = ssub.s32 %s15, 1
      // Predicated region
      $region13: #{nafblock_pallas.1} parent=11 // pred_check
        %p250 = pneg %p62
      $region14: #{nafblock_pallas.1} parent=11 // pred_check_branch
        %252 = sbr.rel (%p250) target = $region16
      $region15: #{nafblock_pallas.1} parent=11 // pred_region
        _
      $region16: #{nafblock_pallas.1} parent=11 // pred_fallthru
        _
      // Predicated region
      $region17: #{nafblock_pallas.1} parent=11 // pred_check
        %p253 = pneg %p83
      $region18: #{nafblock_pallas.1} parent=11 // pred_check_branch
        %255 = sbr.rel (%p253) target = $region20
      $region19: #{nafblock_pallas.1} parent=11 // pred_region
        _
      $region20: #{nafblock_pallas.1} parent=11 // pred_fallthru
        _
      // Predicated region
      $region21: #{nafblock_pallas.1} parent=11 // pred_check
        %p256 = pneg %p104
      $region22: #{nafblock_pallas.1} parent=11 // pred_check_branch
        %258 = sbr.rel (%p256) target = $region24
      $region23: #{nafblock_pallas.1} parent=11 // pred_region
        _
      $region24: #{nafblock_pallas.1} parent=11 // pred_fallthru
        _
      // Predicated region
      $region25: #{nafblock_pallas.1} parent=11 // pred_check
        %p259 = pneg %p125
      $region26: #{nafblock_pallas.1} parent=11 // pred_check_branch
        %261 = sbr.rel (%p259) target = $region28
      $region27: #{nafblock_pallas.1} parent=11 // pred_region
        _
      $region28: #{nafblock_pallas.1} parent=11 // pred_fallthru
        _
      // Predicated region
      $region29: #{nafblock_pallas.1} parent=11 // pred_check
        %p262 = pneg %p146
      $region30: #{nafblock_pallas.1} parent=11 // pred_check_branch
        %264 = sbr.rel (%p262) target = $region32
      $region31: #{nafblock_pallas.1} parent=11 // pred_region
        _
      $region32: #{nafblock_pallas.1} parent=11 // pred_fallthru
        _
      // Predicated region
      $region33: #{nafblock_pallas.1} parent=11 // pred_check
        %p265 = pneg %p167
      $region34: #{nafblock_pallas.1} parent=11 // pred_check_branch
        %267 = sbr.rel (%p265) target = $region36
      $region35: #{nafblock_pallas.1} parent=11 // pred_region
        _
      $region36: #{nafblock_pallas.1} parent=11 // pred_fallthru
        _
      // Predicated region
      $region37: #{nafblock_pallas.1} parent=11 // pred_check
        %p268 = pneg %p188
      $region38: #{nafblock_pallas.1} parent=11 // pred_check_branch
        %270 = sbr.rel (%p268) target = $region40
      $region39: #{nafblock_pallas.1} parent=11 // pred_region
        _
      $region40: #{nafblock_pallas.1} parent=11 // pred_fallthru
        _
      // Predicated region
      $region41: #{nafblock_pallas.1} parent=11 // pred_check
        %p271 = pneg %p209
      $region42: #{nafblock_pallas.1} parent=11 // pred_check_branch
        %273 = sbr.rel (%p271) target = $region44
      $region43: #{nafblock_pallas.1} parent=11 // pred_region
        _
      $region44: #{nafblock_pallas.1} parent=11 // pred_fallthru
        _
    $region12: #{nafblock_pallas.1} parent=5 // pred_fallthru
      _
    %p274 = scmp.lt.s32.totalorder %s15, 2
    // Predicated region
    $region45: #{nafblock_pallas.1} parent=5 // pred_check
      %p275 = pneg %p274
    $region46: #{nafblock_pallas.1} parent=5 // pred_check_branch
      %277 = sbr.rel (%p275) target = $region48
    $region47: #{nafblock_pallas.1} parent=5 // pred_region
      // Predicated region
      $region49: #{nafblock_pallas.1} parent=47 // pred_check
        %p278 = pneg %p35
      $region50: #{nafblock_pallas.1} parent=47 // pred_check_branch
        %280 = sbr.rel (%p278) target = $region52
      $region51: #{nafblock_pallas.1} parent=47 // pred_region
        %p281 = scmp.lt.s32.totalorder %s15, 1
        %s282 = scalar_select %p281, %s15, 1
        %s283 = smul.addr %s282, 2
        %s284 = smul.addr %s283, 4
        %s285 = scalar_lea.vmem %s0, %s284
      $region52: #{nafblock_pallas.1} parent=47 // pred_fallthru
        _
    $region48: #{nafblock_pallas.1} parent=5 // pred_fallthru
      _
    %p286 = scmp.le.s32.totalorder 1, %s15
    %p287 = scmp.lt.s32.totalorder %s15, 3
    %p288 = pnand %p286, %p287
    %p289 = pneg %p288
    // Predicated region
    $region53: #{nafblock_pallas.1} parent=5 // pred_check
      _
    $region54: #{nafblock_pallas.1} parent=5 // pred_check_branch
      %291 = sbr.rel (%p288) target = $region56
    $region55: #{nafblock_pallas.1} parent=5 // pred_region
      %s292 = ssub.s32 %s15, 1
      %p293 = scmp.lt.s32.totalorder %s20, 1
      %s294 = scalar_select %p293, %s20, 1
      %s295 = smul.addr %s294, 2
      %s296 = smul.addr %s295, 4
      %s297 = scalar_lea.vmem %s0, %s296
      %p298 = pneg %p41
      %p299 = pneg %p38
      %p300 = pneg %p62
      %p301 = pneg %p59
      %p302 = pneg %p83
      %p303 = pneg %p80
      %p304 = pneg %p104
      %p305 = pneg %p101
      %p306 = pneg %p125
      %p307 = pneg %p122
      %p308 = pneg %p146
      %p309 = pneg %p143
      %p310 = pneg %p167
      %p311 = pneg %p164
      %p312 = pneg %p188
      %p313 = pneg %p185
      %p314 = pneg %p209
      %p315 = pneg %p206
      %p316 = pneg %p235
      %p317 = pneg %p232
      %p318 = scmp.lt.s32.totalorder %s20, 1
      %s319 = scalar_select %p318, %s20, 1
      %s320 = smul.addr %s319, 2
      %s321 = smul.addr %s320, 4
      %s322 = scalar_lea.vmem %s9, %s321
      %p323 = scmp.lt.s32.totalorder %s20, 1
      %s324 = scalar_select %p323, %s20, 1
      %s325 = smul.addr %s324, 2
      %s326 = smul.addr %s325, 4
      %s327 = scalar_lea.vmem %s0, %s326
      %p328 = scmp.lt.s32.totalorder %s20, 1
      %s329 = scalar_select %p328, %s20, 1
      %s330 = smul.addr %s329, 2
      %s331 = smul.addr %s330, 4
      %s332 = scalar_lea.vmem %s9, %s331
      %v333 = vld [vmem:[%s327] sm:$0xff]
      %v334 = vld [vmem:[%s7] sm:$0xf]
      %v335 = vld [vmem:[%s8] sm:$0xff]
      %v336 = vld [vmem:[%s1] sm:$0xff]
      %338 = vst [vmem:[#allocation1] ss:$2 sm:$0xff] %v333
      %v339 = vld.sshfl [vmem:[#allocation1] sm:$0xff pattern:$0x75316420]
      %v340 = vld.sshfl [vmem:[#allocation1 + $0x8] sm:$0xff pattern:$0x75316420]
      %vm343 = vcmask 1043456
      %v344 = vsel %vm343, %v339, 0.0
      %v345 = vrot.slane %v344, 4
      %v346 = vadd.f32 %v344, %v345
      %v347 = vrot.slane %v346, 2
      %v348 = vadd.f32 %v346, %v347
      %v349 = vrot.slane %v348, 1
      %v350 = vadd.f32 %v348, %v349
      %v351 = vsel %vm343, %v340, 0.0
      %v352 = vrot.slane %v351, 4
      %v353 = vadd.f32 %v351, %v352
      %v354 = vrot.slane %v353, 2
      %v355 = vadd.f32 %v353, %v354
      %v356 = vrot.slane %v355, 1
      %v357 = vadd.f32 %v355, %v356
      %v358 = vrcp.pop 4.0
      %v359 = vmul.f32 4.0, %v358
      %v360 = vsub.f32 1.0, %v359
      %v361 = vmul.f32 %v358, %v360
      %v362 = vadd.f32 %v358, %v361
      %vm363 = vweird.f32 %v358
      %v364 = vsel %vm363, %v358, %v362
      %v365 = vmul.f32 %v350, %v364
      %v366 = vmul.f32 %v357, %v364
      %v369 = vrot.slane %v366, 4
      %v370 = vsel %vm343, %v365, %v369
      %v372 = vsub.f32 %v333, %v370
      %v373 = vmul.f32 %v372, %v372
      %375 = vst [vmem:[#allocation1] ss:$2 sm:$0xff] %v373
      %v376 = vld.sshfl [vmem:[#allocation1] sm:$0xff pattern:$0x75316420]
      %v377 = vld.sshfl [vmem:[#allocation1 + $0x8] sm:$0xff pattern:$0x75316420]
      %v380 = vsel %vm343, %v376, 0.0
      %v381 = vrot.slane %v380, 4
      %v382 = vadd.f32 %v380, %v381
      %v383 = vrot.slane %v382, 2
      %v384 = vadd.f32 %v382, %v383
      %v385 = vrot.slane %v384, 1
      %v386 = vadd.f32 %v384, %v385
      %v387 = vsel %vm343, %v377, 0.0
      %v388 = vrot.slane %v387, 4
      %v389 = vadd.f32 %v387, %v388
      %v390 = vrot.slane %v389, 2
      %v391 = vadd.f32 %v389, %v390
      %v392 = vrot.slane %v391, 1
      %v393 = vadd.f32 %v391, %v392
      %v394 = vmul.f32 %v386, %v364
      %v395 = vmul.f32 %v393, %v364
      %v396 = vadd.f32 %v394, 1e-06
      %v397 = vadd.f32 %v395, 1e-06
      %v398 = vrsqrt.pop %v396
      %v399 = vmul.f32 %v398, %v396
      %v400 = vmul.f32 %v399, %v398
      %v401 = vmul.f32 0.5, %v400
      %v402 = vsub.f32 1.5, %v401
      %v403 = vmul.f32 %v398, %v402
      %vm404 = vweird.f32 %v396
      %vm405 = vweird.f32 %v398
      %vm406 = vmor %vm404, %vm405
      %v407 = vsel %vm406, %v398, %v403
      %v408 = vrsqrt.pop %v397
      %v409 = vmul.f32 %v408, %v397
      %v410 = vmul.f32 %v409, %v408
      %v411 = vmul.f32 0.5, %v410
      %v412 = vsub.f32 1.5, %v411
      %v413 = vmul.f32 %v408, %v412
      %vm414 = vweird.f32 %v397
      %vm415 = vweird.f32 %v408
      %vm416 = vmor %vm414, %vm415
      %v417 = vsel %vm416, %v408, %v413
      %v420 = vrot.slane %v417, 4
      %v421 = vsel %vm343, %v407, %v420
      %v423 = vmul.f32 %v372, %v421
      %v424 = vld [vmem:[%s2] sm:$0xff]
      %426 = vset.pattern.permute.xlu0 9
      %427 = vperm.xlu0 %426, %v335
      %v428 = vpop.permute.xlu0 %427
      %431 = vst [vmem:[#allocation1] ss:$2 sm:$0xff] %v423
      %v432 = vld.sshfl [vmem:[#allocation1] sm:$0xff pattern:$0x75316420]
      %v433 = vld.sshfl [vmem:[#allocation1 + $0x8] sm:$0xff pattern:$0x75316420]
      %vm434 = vcmask 31744
      %v436 = vsel %vm434, %v424, 0
      %v438 = vsel %vm343, %v432, 0
      %v440 = vsel %vm343, %v433, 0
      %442 = vmatpush.msra.mxu0 0.0
      %443 = vmatpush.msra.mxu0 0.0
      %444 = vmatpush.msra.mxu0 0.0
      %445 = vmatpush.msra.mxu0 0.0
      %446 = vmatpush.msra.mxu0 0.0
      %447 = vmatpush.msra.mxu0 0.0
      %448 = vmatpush.msra.mxu0 0.0
      %449 = vmatpush.msra.mxu0 0.0
      %450 = vmatpush.msra.mxu0 0.0
      %451 = vmatpush.msra.mxu0 0.0
      %452 = vmatpush.msra.mxu0 0.0
      %453 = vmatpush.msra.mxu0 0.0
      %454 = vmatpush.msra.mxu0 0.0
      %455 = vmatpush.msra.mxu0 0.0
      %456 = vmatpush.msra.mxu0 0.0
      %457 = vmatpush.msra.mxu0 %v438
      %458 = vmatmul.f32.gmra.mxu0 %v436
      %v459 = vpop.f32.mrf.mxu0
      %v460 = vadd.f32 %v428, %v459
      %461 = vdwg.mxu0
      %462 = vmatpush.msra.mxu0 0.0
      %463 = vmatpush.msra.mxu0 0.0
      %464 = vmatpush.msra.mxu0 0.0
      %465 = vmatpush.msra.mxu0 0.0
      %466 = vmatpush.msra.mxu0 0.0
      %467 = vmatpush.msra.mxu0 0.0
      %468 = vmatpush.msra.mxu0 0.0
      %469 = vmatpush.msra.mxu0 0.0
      %470 = vmatpush.msra.mxu0 0.0
      %471 = vmatpush.msra.mxu0 0.0
      %472 = vmatpush.msra.mxu0 0.0
      %473 = vmatpush.msra.mxu0 0.0
      %474 = vmatpush.msra.mxu0 0.0
      %475 = vmatpush.msra.mxu0 0.0
      %476 = vmatpush.msra.mxu0 0.0
      %477 = vmatpush.msra.mxu0 %v440
      %478 = vmatmul.f32.gmra.mxu0 %v436
      %v479 = vpop.f32.mrf.mxu0
      %v480 = vadd.f32 %v428, %v479
      %481 = vdwg.mxu0
      %482 = vrot.lane.b32.xlu0 %v460, 16
      %v483 = vpop.permute.xlu0 %482
      %484 = vrot.lane.b32.xlu0 %v480, 16
      %v485 = vpop.permute.xlu0 %484
      %v486 = vlaneseq
      %v487 = vand.u32 %v486, 127
      %vm488 = vcmp.lt.s32.totalorder %v487, 16
      %v489 = vsel %vm488, %v483, %v485
      %v490 = vsel %vm488, %v485, %v483
      %v492 = vperm.slane %v336, 0
      %v493 = vperm.slane %v336, 4
      %v496 = vperm.slane %v492, 0
      %v497 = vperm.slane %v493, 0
      %v498 = vmul.f32 %v490, %v496
      %v499 = vmul.f32 %v489, %v497
      %500 = vrot.lane.b32.xlu0 %v498, 1
      %v501 = vpop.permute.xlu0 %500
      %502 = vrot.lane.b32.xlu0 %v499, 1
      %v503 = vpop.permute.xlu0 %502
      %vm504 = vcmp.lt.s32.totalorder %v487, 1
      %v505 = vsel %vm504, %v501, %v503
      %v506 = vsel %vm504, %v503, %v501
      %v507 = vperm.slane %v336, 2
      %v508 = vperm.slane %v336, 6
      %v511 = vperm.slane %v507, 2
      %v512 = vperm.slane %v508, 2
      %v513 = vmul.f32 %v506, %v511
      %v514 = vmul.f32 %v505, %v512
      %515 = vset.pattern.permute.xlu0 0
      %516 = vperm.xlu0 %515, %v335
      %v517 = vpop.permute.xlu0 %516
      %v519 = vmul.f32 %v513, %v517
      %v520 = vmul.f32 %v514, %v517
      %521 = vset.pattern.permute.xlu0 1
      %522 = vperm.xlu0 %521, %v335
      %v523 = vpop.permute.xlu0 %522
      %v525 = vmul.f32 %v498, %v523
      %v526 = vmul.f32 %v499, %v523
      %v527 = vadd.f32 %v519, %v525
      %v528 = vadd.f32 %v520, %v526
      %529 = vrot.lane.b32.xlu0 %v498, 127
      %v530 = vpop.permute.xlu0 %529
      %531 = vrot.lane.b32.xlu0 %v499, 127
      %v532 = vpop.permute.xlu0 %531
      %vm533 = vcmp.lt.s32.totalorder %v487, 127
      %v534 = vsel %vm533, %v530, %v532
      %v535 = vsel %vm533, %v532, %v530
      %v536 = vperm.slane %v336, 3
      %v537 = vperm.slane %v336, 7
      %v540 = vperm.slane %v536, 3
      %v541 = vperm.slane %v537, 3
      %v542 = vmul.f32 %v534, %v540
      %v543 = vmul.f32 %v535, %v541
      %544 = vset.pattern.permute.xlu0 2
      %545 = vperm.xlu0 %544, %v335
      %v546 = vpop.permute.xlu0 %545
      %v548 = vmul.f32 %v542, %v546
      %v549 = vmul.f32 %v543, %v546
      %v550 = vadd.f32 %v527, %v548
      %v551 = vadd.f32 %v528, %v549
      %552 = vrot.lane.b32.xlu0 %v460, 1
      %v553 = vpop.permute.xlu0 %552
      %554 = vrot.lane.b32.xlu0 %v480, 1
      %v555 = vpop.permute.xlu0 %554
      %v556 = vsel %vm504, %v553, %v555
      %v557 = vsel %vm504, %v555, %v553
      %v558 = vmul.f32 %v557, %v511
      %v559 = vmul.f32 %v556, %v512
      %560 = vset.pattern.permute.xlu0 3
      %561 = vperm.xlu0 %560, %v335
      %v562 = vpop.permute.xlu0 %561
      %v564 = vmul.f32 %v558, %v562
      %v565 = vmul.f32 %v559, %v562
      %v566 = vadd.f32 %v550, %v564
      %v567 = vadd.f32 %v551, %v565
      %568 = vset.pattern.permute.xlu0 4
      %569 = vperm.xlu0 %568, %v335
      %v570 = vpop.permute.xlu0 %569
      %v572 = vmul.f32 %v460, %v570
      %v573 = vmul.f32 %v480, %v570
      %v574 = vadd.f32 %v566, %v572
      %v575 = vadd.f32 %v567, %v573
      %576 = vrot.lane.b32.xlu0 %v460, 127
      %v577 = vpop.permute.xlu0 %576
      %578 = vrot.lane.b32.xlu0 %v480, 127
      %v579 = vpop.permute.xlu0 %578
      %v580 = vsel %vm533, %v577, %v579
      %v581 = vsel %vm533, %v579, %v577
      %v582 = vmul.f32 %v580, %v540
      %v583 = vmul.f32 %v581, %v541
      %584 = vset.pattern.permute.xlu0 5
      %585 = vperm.xlu0 %584, %v335
      %v586 = vpop.permute.xlu0 %585
      %v588 = vmul.f32 %v582, %v586
      %v589 = vmul.f32 %v583, %v586
      %v590 = vadd.f32 %v574, %v588
      %v591 = vadd.f32 %v575, %v589
      %592 = vrot.lane.b32.xlu0 %v460, 112
      %v593 = vpop.permute.xlu0 %592
      %594 = vrot.lane.b32.xlu0 %v480, 112
      %v595 = vpop.permute.xlu0 %594
      %vm596 = vcmp.lt.s32.totalorder %v487, 112
      %v597 = vsel %vm596, %v593, %v595
      %v598 = vsel %vm596, %v595, %v593
      %v599 = vperm.slane %v336, 1
      %v600 = vperm.slane %v336, 5
      %v603 = vperm.slane %v599, 1
      %v604 = vperm.slane %v600, 1
      %v605 = vmul.f32 %v597, %v603
      %v606 = vmul.f32 %v598, %v604
      %607 = vrot.lane.b32.xlu0 %v605, 1
      %v608 = vpop.permute.xlu0 %607
      %609 = vrot.lane.b32.xlu0 %v606, 1
      %v610 = vpop.permute.xlu0 %609
      %v611 = vsel %vm504, %v608, %v610
      %v612 = vsel %vm504, %v610, %v608
      %v613 = vmul.f32 %v612, %v511
      %v614 = vmul.f32 %v611, %v512
      %615 = vset.pattern.permute.xlu0 6
      %616 = vperm.xlu0 %615, %v335
      %v617 = vpop.permute.xlu0 %616
      %v619 = vmul.f32 %v613, %v617
      %v620 = vmul.f32 %v614, %v617
      %v621 = vadd.f32 %v590, %v619
      %v622 = vadd.f32 %v591, %v620
      %623 = vset.pattern.permute.xlu0 7
      %624 = vperm.xlu0 %623, %v335
      %v625 = vpop.permute.xlu0 %624
      %v627 = vmul.f32 %v605, %v625
      %v628 = vmul.f32 %v606, %v625
      %v629 = vadd.f32 %v621, %v627
      %v630 = vadd.f32 %v622, %v628
      %631 = vrot.lane.b32.xlu0 %v605, 127
      %v632 = vpop.permute.xlu0 %631
      %633 = vrot.lane.b32.xlu0 %v606, 127
      %v634 = vpop.permute.xlu0 %633
      %v635 = vsel %vm533, %v632, %v634
      %v636 = vsel %vm533, %v634, %v632
      %v637 = vmul.f32 %v635, %v540
      %v638 = vmul.f32 %v636, %v541
      %639 = vset.pattern.permute.xlu0 8
      %640 = vperm.xlu0 %639, %v335
      %v641 = vpop.permute.xlu0 %640
      %v643 = vmul.f32 %v637, %v641
      %v644 = vmul.f32 %v638, %v641
      %v645 = vadd.f32 %v629, %v643
      %v646 = vadd.f32 %v630, %v644
      %647 = vset.pattern.permute.xlu0 10
      %648 = vperm.xlu0 %647, %v335
      %v649 = vpop.permute.xlu0 %648
      %v651 = vadd.f32 %v645, %v649
      %v652 = vadd.f32 %v646, %v649
      %v655 = vrot.slane %v651, 4
      %v656 = vrot.slane %v652, 4
      %v659 = vmul.f32 %v651, %v655
      %v660 = vmul.f32 %v652, %v656
      %v661 = vsel %vm343, %v659, 0.0
      %v662 = vsel %vm343, %v660, 0.0
      %v663 = vadd.f32 %v661, %v662
      %664 = vadd.xlane.f32.xlu0 %v663
      %v665 = vpop.xlane.xlu0 %664
      %v666 = vrcp.pop 256.0
      %v667 = vmul.f32 256.0, %v666
      %v668 = vsub.f32 1.0, %v667
      %v669 = vmul.f32 %v666, %v668
      %v670 = vadd.f32 %v666, %v669
      %vm671 = vweird.f32 %v666
      %v672 = vsel %vm671, %v666, %v670
      %v673 = vmul.f32 %v665, %v672
      %v674 = vld [vmem:[%s3] sm:$0xf]
      %v676 = vsel %vm434, %v674, 0
      %v679 = vsel %vm343, %v673, 0
      %681 = vmatpush.msra.mxu0 0.0
      %682 = vmatpush.msra.mxu0 0.0
      %683 = vmatpush.msra.mxu0 0.0
      %684 = vmatpush.msra.mxu0 0.0
      %685 = vmatpush.msra.mxu0 0.0
      %686 = vmatpush.msra.mxu0 0.0
      %687 = vmatpush.msra.mxu0 0.0
      %688 = vmatpush.msra.mxu0 0.0
      %689 = vmatpush.msra.mxu0 0.0
      %690 = vmatpush.msra.mxu0 0.0
      %691 = vmatpush.msra.mxu0 0.0
      %692 = vmatpush.msra.mxu0 0.0
      %693 = vmatpush.msra.mxu0 0.0
      %694 = vmatpush.msra.mxu0 0.0
      %695 = vmatpush.msra.mxu0 0.0
      %696 = vmatpush.msra.mxu0 %v679
      %697 = vmatmul.f32.gmra.mxu0 %v676
      %v698 = vpop.f32.mrf.mxu0
      %v699 = vadd.f32 %v334, %v698
      %700 = vdwg.mxu0
      %702 = vset.pattern.permute.xlu0 0
      %703 = vperm.xlu0 %702, %v699
      %v704 = vpop.permute.xlu0 %703
      %v706 = vmul.f32 %v659, %v704
      %v707 = vmul.f32 %v660, %v704
      %v708 = vld [vmem:[%s4] sm:$0xf]
      %v710 = vsel %vm434, %v708, 0
      %v713 = vsel %vm343, %v706, 0
      %v716 = vsel %vm343, %v707, 0
      %718 = vmatpush.msra.mxu0 0.0
      %719 = vmatpush.msra.mxu0 0.0
      %720 = vmatpush.msra.mxu0 0.0
      %721 = vmatpush.msra.mxu0 0.0
      %722 = vmatpush.msra.mxu0 0.0
      %723 = vmatpush.msra.mxu0 0.0
      %724 = vmatpush.msra.mxu0 0.0
      %725 = vmatpush.msra.mxu0 0.0
      %726 = vmatpush.msra.mxu0 0.0
      %727 = vmatpush.msra.mxu0 0.0
      %728 = vmatpush.msra.mxu0 0.0
      %729 = vmatpush.msra.mxu0 0.0
      %730 = vmatpush.msra.mxu0 0.0
      %731 = vmatpush.msra.mxu0 0.0
      %732 = vmatpush.msra.mxu0 0.0
      %733 = vmatpush.msra.mxu0 %v713
      %734 = vmatmul.f32.gmra.mxu0 %v710
      %v735 = vpop.f32.mrf.mxu0
      %v736 = vadd.f32 0.0, %v735
      %737 = vdwg.mxu0
      %738 = vmatpush.msra.mxu0 0.0
      %739 = vmatpush.msra.mxu0 0.0
      %740 = vmatpush.msra.mxu0 0.0
      %741 = vmatpush.msra.mxu0 0.0
      %742 = vmatpush.msra.mxu0 0.0
      %743 = vmatpush.msra.mxu0 0.0
      %744 = vmatpush.msra.mxu0 0.0
      %745 = vmatpush.msra.mxu0 0.0
      %746 = vmatpush.msra.mxu0 0.0
      %747 = vmatpush.msra.mxu0 0.0
      %748 = vmatpush.msra.mxu0 0.0
      %749 = vmatpush.msra.mxu0 0.0
      %750 = vmatpush.msra.mxu0 0.0
      %751 = vmatpush.msra.mxu0 0.0
      %752 = vmatpush.msra.mxu0 0.0
      %753 = vmatpush.msra.mxu0 %v716
      %754 = vmatmul.f32.gmra.mxu0 %v710
      %v755 = vpop.f32.mrf.mxu0
      %v756 = vadd.f32 0.0, %v755
      %757 = vdwg.mxu0
      %v760 = vrot.slane %v756, 4
      %v761 = vsel %vm343, %v736, %v760
      %v763 = vadd.f32 %v333, %v761
      %765 = vset.pattern.permute.xlu0 1
      %766 = vperm.xlu0 %765, %v334
      %v767 = vpop.permute.xlu0 %766
      %v769 = vunpack.c.l.s4 839922192
      %v770 = vunpack.c.0.s8 %v769
      %v771 = vperm.slane %v767, %v770
      %v773 = vadd.f32 %v763, %v771
      %775 = vst [vmem:[#allocation1] ss:$2 sm:$0xff] %v773
      %v776 = vld.sshfl [vmem:[#allocation1] sm:$0xff pattern:$0x75316420]
      %v777 = vld.sshfl [vmem:[#allocation1 + $0x8] sm:$0xff pattern:$0x75316420]
      %v780 = vsel %vm343, %v776, 0.0
      %v781 = vrot.slane %v780, 4
      %v782 = vadd.f32 %v780, %v781
      %v783 = vrot.slane %v782, 2
      %v784 = vadd.f32 %v782, %v783
      %v785 = vrot.slane %v784, 1
      %v786 = vadd.f32 %v784, %v785
      %v787 = vsel %vm343, %v777, 0.0
      %v788 = vrot.slane %v787, 4
      %v789 = vadd.f32 %v787, %v788
      %v790 = vrot.slane %v789, 2
      %v791 = vadd.f32 %v789, %v790
      %v792 = vrot.slane %v791, 1
      %v793 = vadd.f32 %v791, %v792
      %v794 = vmul.f32 %v786, %v364
      %v795 = vmul.f32 %v793, %v364
      %v798 = vrot.slane %v795, 4
      %v799 = vsel %vm343, %v794, %v798
      %v801 = vsub.f32 %v773, %v799
      %v802 = vmul.f32 %v801, %v801
      %804 = vst [vmem:[#allocation1] ss:$2 sm:$0xff] %v802
      %v805 = vld.sshfl [vmem:[#allocation1] sm:$0xff pattern:$0x75316420]
      %v806 = vld.sshfl [vmem:[#allocation1 + $0x8] sm:$0xff pattern:$0x75316420]
      %v809 = vsel %vm343, %v805, 0.0
      %v810 = vrot.slane %v809, 4
      %v811 = vadd.f32 %v809, %v810
      %v812 = vrot.slane %v811, 2
      %v813 = vadd.f32 %v811, %v812
      %v814 = vrot.slane %v813, 1
      %v815 = vadd.f32 %v813, %v814
      %v816 = vsel %vm343, %v806, 0.0
      %v817 = vrot.slane %v816, 4
      %v818 = vadd.f32 %v816, %v817
      %v819 = vrot.slane %v818, 2
      %v820 = vadd.f32 %v818, %v819
      %v821 = vrot.slane %v820, 1
      %v822 = vadd.f32 %v820, %v821
      %v823 = vmul.f32 %v815, %v364
      %v824 = vmul.f32 %v822, %v364
      %v825 = vadd.f32 %v823, 1e-06
      %v826 = vadd.f32 %v824, 1e-06
      %v827 = vrsqrt.pop %v825
      %v828 = vmul.f32 %v827, %v825
      %v829 = vmul.f32 %v828, %v827
      %v830 = vmul.f32 0.5, %v829
      %v831 = vsub.f32 1.5, %v830
      %v832 = vmul.f32 %v827, %v831
      %vm833 = vweird.f32 %v825
      %vm834 = vweird.f32 %v827
      %vm835 = vmor %vm833, %vm834
      %v836 = vsel %vm835, %v827, %v832
      %v837 = vrsqrt.pop %v826
      %v838 = vmul.f32 %v837, %v826
      %v839 = vmul.f32 %v838, %v837
      %v840 = vmul.f32 0.5, %v839
      %v841 = vsub.f32 1.5, %v840
      %v842 = vmul.f32 %v837, %v841
      %vm843 = vweird.f32 %v826
      %vm844 = vweird.f32 %v837
      %vm845 = vmor %vm843, %vm844
      %v846 = vsel %vm845, %v837, %v842
      %v849 = vrot.slane %v846, 4
      %v850 = vsel %vm343, %v836, %v849
      %v852 = vmul.f32 %v801, %v850
      %v853 = vld [vmem:[%s5] sm:$0xff]
      %854 = vset.pattern.permute.xlu0 11
      %855 = vperm.xlu0 %854, %v335
      %v856 = vpop.permute.xlu0 %855
      %859 = vst [vmem:[#allocation1] ss:$2 sm:$0xff] %v852
      %v860 = vld.sshfl [vmem:[#allocation1] sm:$0xff pattern:$0x75316420]
      %v861 = vld.sshfl [vmem:[#allocation1 + $0x8] sm:$0xff pattern:$0x75316420]
      %v863 = vsel %vm434, %v853, 0
      %v865 = vsel %vm343, %v860, 0
      %v867 = vsel %vm343, %v861, 0
      %869 = vmatpush.msra.mxu0 0.0
      %870 = vmatpush.msra.mxu0 0.0
      %871 = vmatpush.msra.mxu0 0.0
      %872 = vmatpush.msra.mxu0 0.0
      %873 = vmatpush.msra.mxu0 0.0
      %874 = vmatpush.msra.mxu0 0.0
      %875 = vmatpush.msra.mxu0 0.0
      %876 = vmatpush.msra.mxu0 0.0
      %877 = vmatpush.msra.mxu0 0.0
      %878 = vmatpush.msra.mxu0 0.0
      %879 = vmatpush.msra.mxu0 0.0
      %880 = vmatpush.msra.mxu0 0.0
      %881 = vmatpush.msra.mxu0 0.0
      %882 = vmatpush.msra.mxu0 0.0
      %883 = vmatpush.msra.mxu0 0.0
      %884 = vmatpush.msra.mxu0 %v865
      %885 = vmatmul.f32.gmra.mxu0 %v863
      %v886 = vpop.f32.mrf.mxu0
      %v887 = vadd.f32 %v856, %v886
      %888 = vdwg.mxu0
      %889 = vmatpush.msra.mxu0 0.0
      %890 = vmatpush.msra.mxu0 0.0
      %891 = vmatpush.msra.mxu0 0.0
      %892 = vmatpush.msra.mxu0 0.0
      %893 = vmatpush.msra.mxu0 0.0
      %894 = vmatpush.msra.mxu0 0.0
      %895 = vmatpush.msra.mxu0 0.0
      %896 = vmatpush.msra.mxu0 0.0
      %897 = vmatpush.msra.mxu0 0.0
      %898 = vmatpush.msra.mxu0 0.0
      %899 = vmatpush.msra.mxu0 0.0
      %900 = vmatpush.msra.mxu0 0.0
      %901 = vmatpush.msra.mxu0 0.0
      %902 = vmatpush.msra.mxu0 0.0
      %903 = vmatpush.msra.mxu0 0.0
      %904 = vmatpush.msra.mxu0 %v867
      %905 = vmatmul.f32.gmra.mxu0 %v863
      %v906 = vpop.f32.mrf.mxu0
      %v907 = vadd.f32 %v856, %v906
      %908 = vdwg.mxu0
      %v911 = vrot.slane %v887, 4
      %v912 = vrot.slane %v907, 4
      %v915 = vmul.f32 %v887, %v911
      %v916 = vmul.f32 %v907, %v912
      %v917 = vld [vmem:[%s6] sm:$0xf]
      %v919 = vsel %vm434, %v917, 0
      %v922 = vsel %vm343, %v915, 0
      %v925 = vsel %vm343, %v916, 0
      %927 = vmatpush.msra.mxu0 0.0
      %928 = vmatpush.msra.mxu0 0.0
      %929 = vmatpush.msra.mxu0 0.0
      %930 = vmatpush.msra.mxu0 0.0
      %931 = vmatpush.msra.mxu0 0.0
      %932 = vmatpush.msra.mxu0 0.0
      %933 = vmatpush.msra.mxu0 0.0
      %934 = vmatpush.msra.mxu0 0.0
      %935 = vmatpush.msra.mxu0 0.0
      %936 = vmatpush.msra.mxu0 0.0
      %937 = vmatpush.msra.mxu0 0.0
      %938 = vmatpush.msra.mxu0 0.0
      %939 = vmatpush.msra.mxu0 0.0
      %940 = vmatpush.msra.mxu0 0.0
      %941 = vmatpush.msra.mxu0 0.0
      %942 = vmatpush.msra.mxu0 %v922
      %943 = vmatmul.f32.gmra.mxu0 %v919
      %v944 = vpop.f32.mrf.mxu0
      %v945 = vadd.f32 0.0, %v944
      %946 = vdwg.mxu0
      %947 = vmatpush.msra.mxu0 0.0
      %948 = vmatpush.msra.mxu0 0.0
      %949 = vmatpush.msra.mxu0 0.0
      %950 = vmatpush.msra.mxu0 0.0
      %951 = vmatpush.msra.mxu0 0.0
      %952 = vmatpush.msra.mxu0 0.0
      %953 = vmatpush.msra.mxu0 0.0
      %954 = vmatpush.msra.mxu0 0.0
      %955 = vmatpush.msra.mxu0 0.0
      %956 = vmatpush.msra.mxu0 0.0
      %957 = vmatpush.msra.mxu0 0.0
      %958 = vmatpush.msra.mxu0 0.0
      %959 = vmatpush.msra.mxu0 0.0
      %960 = vmatpush.msra.mxu0 0.0
      %961 = vmatpush.msra.mxu0 0.0
      %962 = vmatpush.msra.mxu0 %v925
      %963 = vmatmul.f32.gmra.mxu0 %v919
      %v964 = vpop.f32.mrf.mxu0
      %v965 = vadd.f32 0.0, %v964
      %966 = vdwg.mxu0
      %v969 = vrot.slane %v965, 4
      %v970 = vsel %vm343, %v945, %v969
      %v972 = vadd.f32 %v773, %v970
      %973 = vset.pattern.permute.xlu0 2
      %974 = vperm.xlu0 %973, %v334
      %v975 = vpop.permute.xlu0 %974
      %v977 = vunpack.c.l.s4 839922192
      %v978 = vunpack.c.0.s8 %v977
      %v979 = vperm.slane %v975, %v978
      %v981 = vadd.f32 %v972, %v979
      %982 = vst [vmem:[%s332] sm:$0xff] %v981
      %p983 = scmp.lt.s32.totalorder %s20, 1
      %s984 = scalar_select %p983, %s20, 1
      %s985 = smul.addr %s984, 2
      %s986 = smul.addr %s985, 4
      %s987 = scalar_lea.vmem %s9, %s986
      // Predicated region
      $region57: #{nafblock_pallas.1} parent=55 // pred_check
        %p988 = pneg %p232
      $region58: #{nafblock_pallas.1} parent=55 // pred_check_branch
        %990 = sbr.rel (%p988) target = $region60
      $region59: #{nafblock_pallas.1} parent=55 // pred_region
        _
      $region60: #{nafblock_pallas.1} parent=55 // pred_fallthru
        _
    $region56: #{nafblock_pallas.1} parent=5 // pred_fallthru
      _
    %p991 = scmp.le.s32.totalorder 2, %s15
    // Predicated region
    $region61: #{nafblock_pallas.1} parent=5 // pred_check
      %p992 = pneg %p991
    $region62: #{nafblock_pallas.1} parent=5 // pred_check_branch
      %994 = sbr.rel (%p992) target = $region64
    $region63: #{nafblock_pallas.1} parent=5 // pred_region
      %s995 = ssub.s32 %s15, 2
      // Predicated region
      $region65: #{nafblock_pallas.1} parent=63 // pred_check
        %p996 = pneg %p238
      $region66: #{nafblock_pallas.1} parent=63 // pred_check_branch
        %998 = sbr.rel (%p996) target = $region68
      $region67: #{nafblock_pallas.1} parent=63 // pred_region
        %p999 = scmp.lt.s32.totalorder %s21, 1
        %s1000 = scalar_select %p999, %s21, 1
        %s1001 = smul.addr %s1000, 2
        %s1002 = smul.addr %s1001, 4
        %s1003 = scalar_lea.vmem %s9, %s1002
      $region68: #{nafblock_pallas.1} parent=63 // pred_fallthru
        _
    $region64: #{nafblock_pallas.1} parent=5 // pred_fallthru
      _
  $region6: #{nafblock_pallas.1} parent=0 // loop_footer
    %s19 = sadd.s32 1, %s15
  $region7: #{nafblock_pallas.1} parent=0 // loop_footer_branch
    %14 = sbr.rel target = $region3
  $region8: #{nafblock_pallas.1} parent=0 // loop_exit
    _

</llo_original>
